<compile_context>
chip_gen: v5e
topology: v5e:2x2
jax: 0.10.0
libtpu: 0.0.40
codegen_flags: <defaults>
</compile_context>

<pallas_src>
import jax
import jax.numpy as jnp
from jax.experimental import pallas as pl
from jax.experimental.pallas import tpu as pltpu


# ---------------------------------------------------------------------------
# helpers
# ---------------------------------------------------------------------------

def _round_up(v, m):
    return (v + m - 1) // m * m


def _sublane(itemsize):
    # sublane packing of the second-minor dim by element size
    return {4: 8, 2: 16, 1: 32}.get(itemsize, 8)


def _tpu_budgets():
    """(max_block_bytes, vmem_limit_cap) sized per TPU generation."""
    try:
        phys_vmem = int(pltpu.get_tpu_info().vmem_capacity_bytes)
    except Exception:
        phys_vmem = 64 << 20                         # conservative (v7x-class)
    if phys_vmem <= (64 << 20):                      # v7x: 64 MiB / TensorCore
        return 8 << 20, 48 << 20
    return 16 << 20, 80 << 20                        # v5e / v6e: 128 MiB


def _choose_batch(n, plane_vmem_bytes, max_block_bytes):
    """Largest divisor B of n whose padded block fits the budget.

    Prefers an even number of grid steps (megacore balance on v7x), ideally
    >=4 steps so each TensorCore still pipelines.  Returns 0 if even a single
    sample does not fit (caller falls back to the two-pass streaming path).
    """
    fitting = [b for b in range(1, n + 1)
               if n % b == 0 and b * plane_vmem_bytes <= max_block_bytes]
    if not fitting:
        return 0
    prefs = (
        [b for b in fitting if (n // b) % 2 == 0 and n // b >= 4],
        [b for b in fitting if (n // b) % 2 == 0],
        [b for b in fitting if n // b >= 2],
        fitting,
    )
    for cand in prefs:
        if cand:
            return max(cand)
    return fitting[-1]


# ---------------------------------------------------------------------------
# main (single-pass) kernel
# ---------------------------------------------------------------------------

def _make_main_kernel(hw, batch):
    inv_hw = 1.0 / float(hw)

    def kernel(x_ref, w1t_ref, w2t_ref, o_ref):
        # x_ref: (B, C, HW) native dtype; w1t: (C, Cr) f32; w2t: (Cr, C) f32.
        # Read the ref directly each time - never keep the full block live.
        avg = jnp.sum(x_ref[...], axis=-1, dtype=jnp.float32) * inv_hw   # (B, C)
        mx = jnp.max(x_ref[...], axis=-1).astype(jnp.float32)            # (B, C)

        # Fused shared MLP: one weight pass for avg AND max (tiny, leave as is).
        pooled = jnp.concatenate([avg, mx], axis=0)                      # (2B, C)
        h = jnp.maximum(
            jnp.dot(pooled, w1t_ref[...], preferred_element_type=jnp.float32),
            0.0)                                                         # (2B, Cr)
        y = jnp.dot(h, w2t_ref[...], preferred_element_type=jnp.float32)  # (2B, C)
        att = jax.nn.sigmoid(y[:batch] + y[batch:])                      # (B, C)

        # Apply attention in the native dtype (single streamed write).
        o_ref[...] = x_ref[...] * att.astype(o_ref.dtype)[:, :, None]

    return kernel


# ---------------------------------------------------------------------------
# two-pass streaming fallback (single sample plane too big for one block)
# ---------------------------------------------------------------------------

def _ca_two_pass(x_flat, w1, w2, *, c_pad, itemsize, max_block_bytes, vmem_cap):
    N, C, HW = x_flat.shape
    dtype = x_flat.dtype

    chunk = (max_block_bytes // (c_pad * itemsize)) // 128 * 128
    chunk = max(128, chunk)
    if chunk >= HW:
        chunk = HW                      # full-extent block, no masking needed
    n_chunks = (HW + chunk - 1) // chunk
    need_mask = (HW % chunk) != 0

    chunk_vmem = c_pad * _round_up(chunk, 128) * itemsize
    stats_vmem = N * 8 * _round_up(C, 128) * 4
    vmem_limit = int(min(vmem_cap,
                         max(32 << 20,
                             4 * chunk_vmem + 4 * stats_vmem + (4 << 20))))

    # ---- pass 1: chunked global avg/max pooling --------------------------
    def pool_kernel(x_ref, sum_ref, max_ref):
        i = pl.program_id(0)
        j = pl.program_id(1)

        @pl.when(j == 0)
        def _():
            sum_ref[i] = jnp.zeros((1, C), jnp.float32)
            max_ref[i] = jnp.full((1, C), -jnp.inf, jnp.float32)

        x = x_ref[...]                                   # (1, C, chunk)
        if need_mask:
            lane = jax.lax.broadcasted_iota(jnp.int32, x.shape, 2)
            valid = (j * chunk + lane) < HW
            x_sum = jnp.where(valid, x, jnp.zeros((), dtype))
            x_max = jnp.where(valid, x, jnp.full((), jnp.finfo(dtype).min, dtype))
        else:
            x_sum = x
            x_max = x
        sum_ref[i] = sum_ref[i] + jnp.sum(x_sum, axis=-1, dtype=jnp.float32)
        max_ref[i] = jnp.maximum(max_ref[i],
                                 jnp.max(x_max, axis=-1).astype(jnp.float32))

    sums, maxs = pl.pallas_call(
        pool_kernel,
        out_shape=(jax.ShapeDtypeStruct((N, 1, C), jnp.float32),
                   jax.ShapeDtypeStruct((N, 1, C), jnp.float32)),
        grid_spec=pltpu.PrefetchScalarGridSpec(
            num_scalar_prefetch=0,
            grid=(N, n_chunks),
            in_specs=[pl.BlockSpec((1, C, chunk), lambda i, j: (i, 0, j))],
            out_specs=[pl.BlockSpec((N, 1, C), lambda i, j: (0, 0, 0)),
                       pl.BlockSpec((N, 1, C), lambda i, j: (0, 0, 0))],
        ),
        compiler_params=pltpu.CompilerParams(
            dimension_semantics=("arbitrary", "arbitrary"),
            vmem_limit_bytes=vmem_limit),
    )(x_flat)

    # ---- tiny shared MLP in plain JAX (roofline noise) --------------------
    avg = sums[:, 0, :] * (1.0 / HW)
    mx = maxs[:, 0, :]
    w1f = jnp.asarray(w1, jnp.float32)
    w2f = jnp.asarray(w2, jnp.float32)

    def mlp(v):
        return jnp.maximum(v @ w1f.T, 0.0) @ w2f.T

    att3 = jax.nn.sigmoid(mlp(avg) + mlp(mx))[:, None, :]     # (N, 1, C) f32

    # ---- pass 2: chunked apply --------------------------------------------
    def apply_kernel(x_ref, att_ref, o_ref):
        i = pl.program_id(0)
        a = att_ref[i].astype(o_ref.dtype)                    # (1, C)
        o_ref[...] = x_ref[...] * a[:, :, None]

    out = pl.pallas_call(
        apply_kernel,
        out_shape=jax.ShapeDtypeStruct((N, C, HW), dtype),
        grid_spec=pltpu.PrefetchScalarGridSpec(
            num_scalar_prefetch=0,
            grid=(N, n_chunks),
            in_specs=[pl.BlockSpec((1, C, chunk), lambda i, j: (i, 0, j)),
                      pl.BlockSpec((N, 1, C), lambda i, j: (0, 0, 0))],
            out_specs=pl.BlockSpec((1, C, chunk), lambda i, j: (i, 0, j)),
        ),
        compiler_params=pltpu.CompilerParams(
            dimension_semantics=("parallel", "arbitrary"),
            vmem_limit_bytes=vmem_limit),
    )(x_flat, att3)
    return out


# ---------------------------------------------------------------------------
# public entry point
# ---------------------------------------------------------------------------

def ca_module(x, w1, w2, *, max_block_bytes=None):
    """Channel attention forward. x: (N, C, H, W). Returns same shape.

    w1: (C//r, C)  -- first 1x1 conv weight (trailing 1x1 dims squeezed)
    w2: (C, C//r)  -- second 1x1 conv weight
    """
    N, C, H, W = x.shape
    Cr = w1.shape[0]
    assert w1.shape == (Cr, C) and w2.shape == (C, Cr)
    assert jnp.issubdtype(x.dtype, jnp.floating), "CAModule expects float input"

    default_block, vmem_cap = _tpu_budgets()
    if max_block_bytes is None:
        max_block_bytes = default_block

    HW = H * W
    x_flat = x.reshape(N, C, HW)                     # merge of trailing dims: free

    itemsize = jnp.dtype(x.dtype).itemsize
    c_pad = _round_up(C, _sublane(itemsize))
    hw_pad = _round_up(HW, 128)
    plane_vmem = c_pad * hw_pad * itemsize           # padded VMEM footprint / sample

    B = _choose_batch(N, plane_vmem, max_block_bytes)

    if B == 0:
        # A single sample's plane exceeds the per-block budget (e.g. large
        # C*HW on v7x's 64 MiB VMEM) -> stream HW chunks in two passes.
        out_flat = _ca_two_pass(x_flat, w1, w2, c_pad=c_pad, itemsize=itemsize,
                                max_block_bytes=max_block_bytes,
                                vmem_cap=vmem_cap)
        return out_flat.reshape(N, C, H, W)

    # Pre-transpose / pre-cast the tiny MLP weights so the kernel does neither.
    w1t = jnp.asarray(w1, jnp.float32).T             # (C, Cr)
    w2t = jnp.asarray(w2, jnp.float32).T             # (Cr, C)
    weight_bytes = 2 * C * Cr * 4

    block_vmem = B * plane_vmem
    # double-buffered in + out blocks + weights + small temporaries, capped per gen
    vmem_limit = int(min(vmem_cap,
                         max(32 << 20,
                             4 * block_vmem + 4 * weight_bytes + (4 << 20))))

    kernel = _make_main_kernel(HW, B)
    out_flat = pl.pallas_call(
        kernel,
        out_shape=jax.ShapeDtypeStruct((N, C, HW), x.dtype),
        grid_spec=pltpu.PrefetchScalarGridSpec(
            num_scalar_prefetch=0,
            grid=(N // B,),
            in_specs=[
                pl.BlockSpec((B, C, HW), lambda n: (n, 0, 0)),
                pl.BlockSpec((C, Cr), lambda n: (0, 0)),
                pl.BlockSpec((Cr, C), lambda n: (0, 0)),
            ],
            out_specs=pl.BlockSpec((B, C, HW), lambda n: (n, 0, 0)),
        ),
        compiler_params=pltpu.CompilerParams(
            dimension_semantics=("parallel",),
            vmem_limit_bytes=vmem_limit),
    )(x_flat, w1t, w2t)

    return out_flat.reshape(N, C, H, W)


# ---------------------------------------------------------------------------
# pure-JAX reference
# ---------------------------------------------------------------------------

def ca_module_ref(x, w1, w2):
    avg = jnp.mean(x, axis=(2, 3))            # (N, C)
    mx = jnp.max(x, axis=(2, 3))              # (N, C)

    def mlp(v):
        h = jnp.maximum(v @ w1.T, 0.0)        # (N, Cr)
        return h @ w2.T                       # (N, C)

    att = jax.nn.sigmoid(mlp(avg) + mlp(mx))  # (N, C)
    return x * att[:, :, None, None]


if __name__ == "__main__":
    key = jax.random.PRNGKey(0)
    k_x, k_w1, k_w2 = jax.random.split(key, 3)

    N, C, H, W = 2, 4, 16, 16
    reduction = 2
    Cr = C // reduction

    x = jax.random.normal(k_x, (N, C, H, W), dtype=jnp.float32)
    # deterministic synthetic weights (Conv2d(C, Cr, 1) / Conv2d(Cr, C, 1))
    w1 = 0.1 * jax.random.normal(k_w1, (Cr, C), dtype=jnp.float32)
    w2 = 0.1 * jax.random.normal(k_w2, (C, Cr), dtype=jnp.float32)

    # 1) main single-pass path (HW multiple of 128)
    out = jax.block_until_ready(ca_module(x, w1, w2))
    ref = ca_module_ref(x, w1, w2)
    assert out.shape == (N, C, H, W)
    assert jnp.allclose(out, ref, atol=1e-5, rtol=1e-5), "mismatch (main path)"

    # 2) main path with HW not a multiple of 128 (no wrapper pad/slice any more)
    x2 = jax.random.normal(k_x, (N, C, 7, 7), dtype=jnp.float32)
    out2 = jax.block_until_ready(ca_module(x2, w1, w2))
    assert jnp.allclose(out2, ca_module_ref(x2, w1, w2),
                        atol=1e-5, rtol=1e-5), "mismatch (non-128 HW)"

    # 3) two-pass streaming fallback (force a tiny block budget)
    out3 = jax.block_until_ready(ca_module(x, w1, w2, max_block_bytes=1024))
    assert jnp.allclose(out3, ref, atol=1e-5, rtol=1e-5), "mismatch (fallback)"

    # 4) fallback with a ragged last HW chunk (masked tail path)
    x4 = jax.random.normal(k_x, (N, C, 10, 13), dtype=jnp.float32)
    out4 = jax.block_until_ready(ca_module(x4, w1, w2, max_block_bytes=1024))
    assert jnp.allclose(out4, ca_module_ref(x4, w1, w2),
                        atol=1e-5, rtol=1e-5), "mismatch (fallback, masked tail)"

    print("KERNEL_OK")
</pallas_src>

<mosaic_0001>
module attributes {stable_mosaic.version = 11 : i64} {
  func.func @kernel(%arg0: i32, %arg1: memref<1x4x256xf32, #tpu.memory_space<vmem>>, %arg2: memref<4x2xf32, #tpu.memory_space<vmem>>, %arg3: memref<2x4xf32, #tpu.memory_space<vmem>>, %arg4: memref<1x4x256xf32, #tpu.memory_space<vmem>>) attributes {dimension_semantics = [#tpu.dimension_semantics<parallel>], iteration_bounds = array<i64: 2>, scalar_prefetch = 0 : i64, scratch_operands = 0 : i64, tpu.core_type = #tpu.core_type<tc>, window_params = [{transform_indices = @transform_0, window_bounds = array<i64: 1, 4, 256>}, {pipeline_mode = #tpu.pipeline_mode<synchronous>, transform_indices = @transform_1, window_bounds = array<i64: 4, 2>}, {pipeline_mode = #tpu.pipeline_mode<synchronous>, transform_indices = @transform_2, window_bounds = array<i64: 2, 4>}, {transform_indices = @transform_3, window_bounds = array<i64: 1, 4, 256>}]} {
    %c0 = arith.constant 0 : index
    %c0_0 = arith.constant 0 : index
    %c0_1 = arith.constant 0 : index
    %0 = vector.load %arg1[%c0, %c0_0, %c0_1] : memref<1x4x256xf32, #tpu.memory_space<vmem>>, vector<1x4x256xf32>
    %cst = arith.constant dense<0.000000e+00> : vector<1x4xf32>
    %1 = vector.multi_reduction <add>, %0, %cst [2] : vector<1x4x256xf32> to vector<1x4xf32>
    %cst_2 = arith.constant 3.906250e-03 : f32
    %2 = vector.broadcast %cst_2 : f32 to vector<1x4xf32>
    %3 = arith.mulf %1, %2 : vector<1x4xf32>
    %c0_3 = arith.constant 0 : index
    %c0_4 = arith.constant 0 : index
    %c0_5 = arith.constant 0 : index
    %4 = vector.load %arg1[%c0_3, %c0_4, %c0_5] : memref<1x4x256xf32, #tpu.memory_space<vmem>>, vector<1x4x256xf32>
    %cst_6 = arith.constant dense<0xFF800000> : vector<1x4xf32>
    %5 = vector.multi_reduction <maximumf>, %4, %cst_6 [2] : vector<1x4x256xf32> to vector<1x4xf32>
    %6 = tpu.concatenate %3, %5 in 0 : vector<1x4xf32>, vector<1x4xf32> -> vector<2x4xf32>
    %c0_7 = arith.constant 0 : index
    %c0_8 = arith.constant 0 : index
    %7 = vector.load %arg2[%c0_7, %c0_8] : memref<4x2xf32, #tpu.memory_space<vmem>>, vector<4x2xf32>
    %cst_9 = arith.constant dense<0.000000e+00> : vector<2x2xf32>
    %8 = tpu.matmul %6, %7, %cst_9 {dimension_numbers = #tpu.dot_dimension_numbers<[1], [0], [0], [1], [0, 0, 1, 1], [], []>} : vector<2x4xf32>, vector<4x2xf32>, vector<2x2xf32> -> vector<2x2xf32>
    %cst_10 = arith.constant 0.000000e+00 : f32
    %9 = vector.broadcast %cst_10 : f32 to vector<2x2xf32>
    %10 = arith.maximumf %8, %9 : vector<2x2xf32>
    %c0_11 = arith.constant 0 : index
    %c0_12 = arith.constant 0 : index
    %11 = vector.load %arg3[%c0_11, %c0_12] : memref<2x4xf32, #tpu.memory_space<vmem>>, vector<2x4xf32>
    %cst_13 = arith.constant dense<0.000000e+00> : vector<2x4xf32>
    %12 = tpu.matmul %10, %11, %cst_13 {dimension_numbers = #tpu.dot_dimension_numbers<[1], [0], [0], [1], [0, 0, 1, 1], [], []>} : vector<2x2xf32>, vector<2x4xf32>, vector<2x4xf32> -> vector<2x4xf32>
    %13 = vector.extract_strided_slice %12 {offsets = [0, 0], sizes = [1, 4], strides = [1, 1]} : vector<2x4xf32> to vector<1x4xf32>
    %14 = vector.extract_strided_slice %12 {offsets = [1, 0], sizes = [1, 4], strides = [1, 1]} : vector<2x4xf32> to vector<1x4xf32>
    %15 = arith.addf %13, %14 : vector<1x4xf32>
    %16 = arith.negf %15 : vector<1x4xf32>
    %17 = math.exp %16 : vector<1x4xf32>
    %cst_14 = arith.constant 1.000000e+00 : f32
    %18 = vector.broadcast %cst_14 : f32 to vector<1x4xf32>
    %19 = arith.addf %18, %17 : vector<1x4xf32>
    %20 = arith.divf %18, %19 : vector<1x4xf32>
    %c0_15 = arith.constant 0 : index
    %c0_16 = arith.constant 0 : index
    %c0_17 = arith.constant 0 : index
    %21 = vector.load %arg1[%c0_15, %c0_16, %c0_17] : memref<1x4x256xf32, #tpu.memory_space<vmem>>, vector<1x4x256xf32>
    %22 = vector.shape_cast %20 : vector<1x4xf32> to vector<1x4x1xf32>
    %23 = vector.broadcast %22 : vector<1x4x1xf32> to vector<1x4x256xf32>
    %24 = arith.mulf %21, %23 : vector<1x4x256xf32>
    %c0_18 = arith.constant 0 : index
    %c0_19 = arith.constant 0 : index
    %c0_20 = arith.constant 0 : index
    %25 = vector.load %arg4[%c0_18, %c0_19, %c0_20] : memref<1x4x256xf32, #tpu.memory_space<vmem>>, vector<1x4x256xf32>
    tpu.vector_store %arg4[%c0_18, %c0_19, %c0_20], %24 {strides = array<i32>} : memref<1x4x256xf32, #tpu.memory_space<vmem>>, vector<1x4x256xf32>,
    return
  }
  func.func @transform_0(%arg0: i32) -> (i32, i32, i32) {
    %c0_i32 = arith.constant 0 : i32
    %c0_i32_0 = arith.constant 0 : i32
    %c0_i32_1 = arith.constant 0 : i32
    return %arg0, %c0_i32, %c0_i32_0 : i32, i32, i32
  }
  func.func @transform_1(%arg0: i32) -> (i32, i32) {
    %c0_i32 = arith.constant 0 : i32
    %c0_i32_0 = arith.constant 0 : i32
    %c0_i32_1 = arith.constant 0 : i32
    return %c0_i32, %c0_i32_0 : i32, i32
  }
  func.func @transform_2(%arg0: i32) -> (i32, i32) {
    %c0_i32 = arith.constant 0 : i32
    %c0_i32_0 = arith.constant 0 : i32
    %c0_i32_1 = arith.constant 0 : i32
    return %c0_i32, %c0_i32_0 : i32, i32
  }
  func.func @transform_3(%arg0: i32) -> (i32, i32, i32) {
    %c0_i32 = arith.constant 0 : i32
    %c0_i32_0 = arith.constant 0 : i32
    %c0_i32_1 = arith.constant 0 : i32
    return %arg0, %c0_i32, %c0_i32_0 : i32, i32, i32
  }
}

</mosaic_0001>

<llo_original>
// kernel: tpu_custom_call.1
$region0: #{tpu_custom_call.1}
  #allocation0 [shape = 'u32[]', space=smem, size = 0x4, offset = 0x4, fixed_abs, tag = 'smem constant byte address 0x4 - core index']
  #allocation1 [shape = 'u32[72,128]{1,0:T(1,128)}', space=vmem, size = 0x9000, scoped, tag = 'internal scratch']
  %s0 = inlined_call_operand.hbm [shape: f32[2,4,256], index: 0, kind: input, shape index: {}]
  %s1 = inlined_call_operand.vmem [shape: f32[4,2], index: 1, kind: input, shape index: {}]
  %s2 = inlined_call_operand.vmem [shape: f32[2,4], index: 2, kind: input, shape index: {}]
  %s3 = inlined_call_operand.hbm [shape: f32[2,4,256], index: 3, kind: output, shape index: {}]
  %s4 = sld [smem:[#allocation0]]
  $region49: #{tpu_custom_call.1} parent=0
    _
  %s6 = ssub.s32 1, %s4
  %s7 = scalar_select 0, %s6, %s4
  $region1: #{tpu_custom_call.1} parent=0
    #allocation2 [shape = 'u8[8192]{0}', space=vmem, size = 0x2000, scoped, tag = 'input window, operand 0']
    #allocation3 [shape = 's32[2]{0}', space=sflag, size = 0x8, scoped, tag = 'scoped memory for tpu_custom_call.1']
    #allocation4 [shape = 's32[2]{0}', space=sflag, size = 0x8, scoped, tag = 'scoped memory for tpu_custom_call.1']
    #allocation5 [shape = 'u8[8192]{0}', space=vmem, size = 0x2000, scoped, tag = 'output window, operand 0']
    %8 = vsyncpa [#allocation3], 0
    %s9 = scalar_lea.sflag [#allocation3], 1
    %10 = vsyncpa %s9, 0
    %11 = vsyncpa [#allocation4], 0
    %s12 = scalar_lea.sflag [#allocation4], 1
    %13 = vsyncpa %s12, 0
    loop: start=0, step=1, limit=4
    $region2: #{tpu_custom_call.1} parent=1 // loop_pre_header
      _
    $region3: #{tpu_custom_call.1} parent=1 // loop_header
      %s15 = sphi 0, %s19
      %p16 = scmp.ge.s32.totalorder %s15, 4
      %s25 = sphi 0, %s27
      %s28 = sphi 0, %s25
      %s29 = sphi 0, %s28
      %s45 = sphi 0, %s29
      %s49 = sphi 0, %s49
      %s51 = sphi 0, %s49
      %s52 = sphi 0, %s51
      %s66 = sphi 0, %s52
      %s70 = sphi 0, %s70
      %s72 = sphi 0, %s70
      %s73 = sphi 0, %s72
      %s87 = sphi 0, %s73
      %s93 = sphi 0, %s95
      %s96 = sphi 0, %s93
      %s97 = sphi 0, %s96
      %s113 = sphi 0, %s97
    $region4: #{tpu_custom_call.1} parent=1 // loop_header_branch
      %18 = sbr.rel (%p16) target = $region8
    $region5: #{tpu_custom_call.1} parent=1 // loop_body
      %s20 = ssub.s32 %s15, 1
      %s21 = ssub.s32 %s15, 2
      %s22 = sadd.s32 %s15, 1
      %s23 = ssub.s32 %s15, %s22
      %p24 = scmp.eq.s32.totalorder %s23, 0
      %s26 = sadd.s32 %s25, 1
      %s27 = scalar_select %p24, %s25, %s26
      %p30 = pneg %p24
      %p31 = scmp.eq.s32.totalorder %s15, 1
      %p32 = por %p30, %p31
      %p33 = scmp.ne.s32.totalorder %s25, %s28
      %p34 = scmp.eq.s32.totalorder %s15, 0
      %p35 = por %p33, %p34
      %p36 = scmp.ne.s32.totalorder %s25, %s28
      %p37 = scmp.eq.s32.totalorder %s20, 1
      %p38 = por %p36, %p37
      %p39 = scmp.ne.s32.totalorder %s28, %s29
      %p40 = scmp.eq.s32.totalorder %s20, 0
      %p41 = por %p39, %p40
      %p42 = scmp.ne.s32.totalorder %s28, %s29
      %p43 = scmp.eq.s32.totalorder %s21, 1
      %p44 = por %p42, %p43
      %p46 = scmp.ne.s32.totalorder %s29, %s45
      %p47 = scmp.eq.s32.totalorder %s21, 0
      %p48 = por %p46, %p47
      %s50 = sadd.s32 %s49, 1
      %p53 = scmp.eq.s32.totalorder %s15, 1
      %p54 = scmp.ne.s32.totalorder %s49, %s51
      %p55 = scmp.eq.s32.totalorder %s15, 0
      %p56 = por %p54, %p55
      %p57 = scmp.ne.s32.totalorder %s49, %s51
      %p58 = scmp.eq.s32.totalorder %s20, 1
      %p59 = por %p57, %p58
      %p60 = scmp.ne.s32.totalorder %s51, %s52
      %p61 = scmp.eq.s32.totalorder %s20, 0
      %p62 = por %p60, %p61
      %p63 = scmp.ne.s32.totalorder %s51, %s52
      %p64 = scmp.eq.s32.totalorder %s21, 1
      %p65 = por %p63, %p64
      %p67 = scmp.ne.s32.totalorder %s52, %s66
      %p68 = scmp.eq.s32.totalorder %s21, 0
      %p69 = por %p67, %p68
      %s71 = sadd.s32 %s70, 1
      %p74 = scmp.eq.s32.totalorder %s15, 1
      %p75 = scmp.ne.s32.totalorder %s70, %s72
      %p76 = scmp.eq.s32.totalorder %s15, 0
      %p77 = por %p75, %p76
      %p78 = scmp.ne.s32.totalorder %s70, %s72
      %p79 = scmp.eq.s32.totalorder %s20, 1
      %p80 = por %p78, %p79
      %p81 = scmp.ne.s32.totalorder %s72, %s73
      %p82 = scmp.eq.s32.totalorder %s20, 0
      %p83 = por %p81, %p82
      %p84 = scmp.ne.s32.totalorder %s72, %s73
      %p85 = scmp.eq.s32.totalorder %s21, 1
      %p86 = por %p84, %p85
      %p88 = scmp.ne.s32.totalorder %s73, %s87
      %p89 = scmp.eq.s32.totalorder %s21, 0
      %p90 = por %p88, %p89
      %s91 = ssub.s32 %s15, %s22
      %p92 = scmp.eq.s32.totalorder %s91, 0
      %s94 = sadd.s32 %s93, 1
      %s95 = scalar_select %p92, %s93, %s94
      %p98 = pneg %p92
      %p99 = scmp.eq.s32.totalorder %s15, 1
      %p100 = por %p98, %p99
      %p101 = scmp.ne.s32.totalorder %s93, %s96
      %p102 = scmp.eq.s32.totalorder %s15, 0
      %p103 = por %p101, %p102
      %p104 = scmp.ne.s32.totalorder %s93, %s96
      %p105 = scmp.eq.s32.totalorder %s20, 1
      %p106 = por %p104, %p105
      %p107 = scmp.ne.s32.totalorder %s96, %s97
      %p108 = scmp.eq.s32.totalorder %s20, 0
      %p109 = por %p107, %p108
      %p110 = scmp.ne.s32.totalorder %s96, %s97
      %p111 = scmp.eq.s32.totalorder %s21, 1
      %p112 = por %p110, %p111
      %p114 = scmp.ne.s32.totalorder %s97, %s113
      %p115 = scmp.eq.s32.totalorder %s21, 0
      %p116 = por %p114, %p115
      %p117 = scmp.le.s32.totalorder 1, %s15
      %p118 = scmp.lt.s32.totalorder %s15, 3
      %p119 = pnand %p117, %p118
      %p120 = pneg %p119
      // Predicated region
      $region9: #{tpu_custom_call.1} parent=5 // pred_check
        _
      $region10: #{tpu_custom_call.1} parent=5 // pred_check_branch
        %122 = sbr.rel (%p119) target = $region12
      $region11: #{tpu_custom_call.1} parent=5 // pred_region
        %s123 = ssub.s32 %s15, 1
        // Predicated region
        $region13: #{tpu_custom_call.1} parent=11 // pred_check
          %p124 = pneg %p62
        $region14: #{tpu_custom_call.1} parent=11 // pred_check_branch
          %126 = sbr.rel (%p124) target = $region16
        $region15: #{tpu_custom_call.1} parent=11 // pred_region
          _
        $region16: #{tpu_custom_call.1} parent=11 // pred_fallthru
          _
        // Predicated region
        $region17: #{tpu_custom_call.1} parent=11 // pred_check
          %p127 = pneg %p83
        $region18: #{tpu_custom_call.1} parent=11 // pred_check_branch
          %129 = sbr.rel (%p127) target = $region20
        $region19: #{tpu_custom_call.1} parent=11 // pred_region
          _
        $region20: #{tpu_custom_call.1} parent=11 // pred_fallthru
          _
      $region12: #{tpu_custom_call.1} parent=5 // pred_fallthru
        _
      %p130 = scmp.lt.s32.totalorder %s15, 2
      // Predicated region
      $region21: #{tpu_custom_call.1} parent=5 // pred_check
        %p131 = pneg %p130
      $region22: #{tpu_custom_call.1} parent=5 // pred_check_branch
        %133 = sbr.rel (%p131) target = $region24
      $region23: #{tpu_custom_call.1} parent=5 // pred_region
        // Predicated region
        $region25: #{tpu_custom_call.1} parent=23 // pred_check
          %p134 = pneg %p35
        $region26: #{tpu_custom_call.1} parent=23 // pred_check_branch
          %136 = sbr.rel (%p134) target = $region28
        $region27: #{tpu_custom_call.1} parent=23 // pred_region
          %s137 = sand.u32 %s25, 1
          %s138 = scalar_lea.sflag [#allocation3], %s137
          %s139 = sand.u32 %s25, 1
          %s140 = smul.addr %s139, 8
          %s141 = scalar_lea.vmem [#allocation2], %s140
          %143 = vsyncadd %s138, 0
          %s144 = smul.addr %s15, 2
          %s145 = smul.addr %s144, 4
          %s146 = scalar_lea.hbm %s0, %s145
          %s148 = sshll.u32 %s146, 4
          %s149 = int_to_ptr.hbm [resolvable:$true] %s148
          %s150 = sshll.u32 %s141, 4
          %s151 = int_to_ptr.vmem [resolvable:$true] %s150
          %153 = dma.hbm_to_vmem [thread:$0]  %s149, 128, %s151, %s138
        $region28: #{tpu_custom_call.1} parent=23 // pred_fallthru
          _
      $region24: #{tpu_custom_call.1} parent=5 // pred_fallthru
        _
      %p154 = scmp.le.s32.totalorder 1, %s15
      %p155 = scmp.lt.s32.totalorder %s15, 3
      %p156 = pnand %p154, %p155
      %p157 = pneg %p156
      // Predicated region
      $region29: #{tpu_custom_call.1} parent=5 // pred_check
        _
      $region30: #{tpu_custom_call.1} parent=5 // pred_check_branch
        %159 = sbr.rel (%p156) target = $region32
      $region31: #{tpu_custom_call.1} parent=5 // pred_region
        %s160 = ssub.s32 %s15, 1
        %s161 = sand.u32 %s28, 1
        %s162 = scalar_lea.sflag [#allocation3], %s161
        %s163 = sand.u32 %s28, 1
        %s164 = smul.addr %s163, 8
        %s165 = scalar_lea.vmem [#allocation2], %s164
        // Predicated region
        $region33: #{tpu_custom_call.1} parent=31 // pred_check
          %p166 = pneg %p41
        $region34: #{tpu_custom_call.1} parent=31 // pred_check_branch
          %168 = sbr.rel (%p166) target = $region36
        $region35: #{tpu_custom_call.1} parent=31 // pred_region
          %170 = dma.done %s162, 128
        $region36: #{tpu_custom_call.1} parent=31 // pred_fallthru
          _
        %s171 = sand.u32 %s28, 1
        %s172 = scalar_lea.sflag [#allocation3], %s171
        %s173 = sand.u32 %s28, 1
        %s174 = smul.addr %s173, 8
        %s175 = scalar_lea.vmem [#allocation2], %s174
        %p176 = pneg %p41
        %p177 = pneg %p38
        %p178 = pneg %p62
        %p179 = pneg %p59
        %p180 = pneg %p83
        %p181 = pneg %p80
        %p182 = pneg %p109
        %p183 = pneg %p106
        %s184 = sand.u32 %s96, 1
        %s185 = scalar_lea.sflag [#allocation4], %s184
        %s186 = sand.u32 %s96, 1
        %s187 = smul.addr %s186, 8
        %s188 = scalar_lea.vmem [#allocation5], %s187
        %v189 = vld [vmem:[%s165] sm:$0xff]
        %191 = vst [vmem:[#allocation1] ss:$2 sm:$0xff] %v189
        %v192 = vld.sshfl [vmem:[#allocation1] sm:$0xff pattern:$0x75316420]
        %v193 = vld.sshfl [vmem:[#allocation1 + $0x8] sm:$0xff pattern:$0x75316420]
        %vm196 = vcmask 1043456
        %v197 = vsel %vm196, %v192, 0.0
        %v198 = vsel %vm196, %v193, 0.0
        %v199 = vadd.f32 %v197, %v198
        %200 = vadd.xlane.f32.xlu0 %v199
        %v201 = vpop.xlane.xlu0 %200
        %v202 = vmul.f32 %v201, 0.00390625
        %203 = vst [vmem:[#allocation1] ss:$2 sm:$0xff] %v189
        %v204 = vld.sshfl [vmem:[#allocation1] sm:$0xff pattern:$0x75316420]
        %v205 = vld.sshfl [vmem:[#allocation1 + $0x8] sm:$0xff pattern:$0x75316420]
        %v208 = vsel %vm196, %v204, -inf
        %v209 = vsel %vm196, %v205, -inf
        %v210 = vmax.f32 %v208, %v209
        %211 = vmax.xlane.f32.xlu0 %v210
        %v212 = vpop.xlane.xlu0 %211
        %v214 = vlaneseq
        %v215 = vand.u32 %v214, 127
        %v216 = vperm.slane %v202, %v215
        %v219 = vperm.slane %v212, %v215
        %vm221 = vcmask 1040384
        %v222 = vsel %vm221, %v216, %v219
        %v223 = vld [vmem:[%s1] sm:$0xf]
        %vm224 = vcmask 31744
        %v226 = vsel %vm224, %v222, 0
        %v229 = vsel %vm196, %v223, 0
        %231 = vmatpush.msra.mxu0 0.0
        %232 = vmatpush.msra.mxu0 0.0
        %233 = vmatpush.msra.mxu0 0.0
        %234 = vmatpush.msra.mxu0 0.0
        %235 = vmatpush.msra.mxu0 0.0
        %236 = vmatpush.msra.mxu0 0.0
        %237 = vmatpush.msra.mxu0 0.0
        %238 = vmatpush.msra.mxu0 0.0
        %239 = vmatpush.msra.mxu0 0.0
        %240 = vmatpush.msra.mxu0 0.0
        %241 = vmatpush.msra.mxu0 0.0
        %242 = vmatpush.msra.mxu0 0.0
        %243 = vmatpush.msra.mxu0 0.0
        %244 = vmatpush.msra.mxu0 0.0
        %245 = vmatpush.msra.mxu0 0.0
        %246 = vmatpush.msra.mxu0 %v229
        %247 = vmatmul.f32.gmra.mxu0 %v226
        %v248 = vpop.f32.mrf.mxu0
        %v249 = vadd.f32 0.0, %v248
        %250 = vdwg.mxu0
        %v251 = vmax.f32 %v249, 0.0
        %v252 = vld [vmem:[%s2] sm:$0x3]
        %vm253 = vcmask 15360
        %v255 = vsel %vm253, %v251, 0
        %vm257 = vcmask 1041408
        %v259 = vsel %vm257, %v252, 0
        %261 = vmatpush.msra.mxu0 0.0
        %262 = vmatpush.msra.mxu0 0.0
        %263 = vmatpush.msra.mxu0 0.0
        %264 = vmatpush.msra.mxu0 0.0
        %265 = vmatpush.msra.mxu0 0.0
        %266 = vmatpush.msra.mxu0 0.0
        %267 = vmatpush.msra.mxu0 0.0
        %268 = vmatpush.msra.mxu0 0.0
        %269 = vmatpush.msra.mxu0 0.0
        %270 = vmatpush.msra.mxu0 0.0
        %271 = vmatpush.msra.mxu0 0.0
        %272 = vmatpush.msra.mxu0 0.0
        %273 = vmatpush.msra.mxu0 0.0
        %274 = vmatpush.msra.mxu0 0.0
        %275 = vmatpush.msra.mxu0 0.0
        %276 = vmatpush.msra.mxu0 %v259
        %277 = vmatmul.f32.gmra.mxu0 %v255
        %v278 = vpop.f32.mrf.mxu0
        %v279 = vadd.f32 0.0, %v278
        %280 = vdwg.mxu0
        %v282 = vrot.slane %v279, 1
        %v284 = vadd.f32 %v279, %v282
        %v285 = vxor.u32 %v284, 2147483648
        %v286 = vmul.f32 %v285, 1.442695
        %v287 = vpow.pop %v286
        %v288 = vadd.f32 %v287, 1.0
        %v289 = vrcp.pop %v288
        %v290 = vmul.f32 %v288, %v289
        %v291 = vsub.f32 1.0, %v290
        %v292 = vmul.f32 %v289, %v291
        %v293 = vadd.f32 %v289, %v292
        %vm294 = vweird.f32 %v288
        %vm295 = vweird.f32 %v289
        %vm296 = vmor %vm294, %vm295
        %v297 = vsel %vm296, %v289, %v293
        %v298 = vand.u32 2147483647, %v288
        %vm299 = vcmp.eq.f32.partialorder %v298, 8.507059e+37
        %v300 = vand.u32 %v288, 2147483648
        %v301 = vor.u32 1.1754944e-38, %v300
        %v302 = vsel %vm299, %v301, %v297
        %v303 = vmul.f32 1.0, %v302
        %v304 = vperm.slane %v303, 0
        %v305 = vlaneseq
        %v306 = vshrl.u32 %v305, 7
        %308 = vset.pattern.permute.xlu0 %v306
        %309 = vperm.xlu0 %308, %v304
        %v310 = vpop.permute.xlu0 %309
        %v313 = vunpack.c.l.s4 839922192
        %v314 = vunpack.c.0.s8 %v313
        %v315 = vperm.slane %v310, %v314
        %v317 = vmul.f32 %v189, %v315
        %318 = vst [vmem:[%s188] sm:$0xff] %v317
        %s319 = sand.u32 %s96, 1
        %s320 = scalar_lea.sflag [#allocation4], %s319
        %s321 = sand.u32 %s96, 1
        %s322 = smul.addr %s321, 8
        %s323 = scalar_lea.vmem [#allocation5], %s322
        // Predicated region
        $region37: #{tpu_custom_call.1} parent=31 // pred_check
          %p324 = pneg %p106
        $region38: #{tpu_custom_call.1} parent=31 // pred_check_branch
          %326 = sbr.rel (%p324) target = $region40
        $region39: #{tpu_custom_call.1} parent=31 // pred_region
          %328 = vsyncadd %s320, 0
          %s329 = smul.addr %s20, 2
          %s330 = smul.addr %s329, 4
          %s331 = scalar_lea.hbm %s3, %s330
          %s333 = sshll.u32 %s323, 4
          %s334 = int_to_ptr.vmem [resolvable:$true] %s333
          %s335 = sshll.u32 %s331, 4
          %s336 = int_to_ptr.hbm [resolvable:$true] %s335
          %338 = dma.vmem_to_hbm [thread:$0]  %s334, 128, %s336, %s320
        $region40: #{tpu_custom_call.1} parent=31 // pred_fallthru
          _
      $region32: #{tpu_custom_call.1} parent=5 // pred_fallthru
        _
      %p339 = scmp.le.s32.totalorder 2, %s15
      // Predicated region
      $region41: #{tpu_custom_call.1} parent=5 // pred_check
        %p340 = pneg %p339
      $region42: #{tpu_custom_call.1} parent=5 // pred_check_branch
        %342 = sbr.rel (%p340) target = $region44
      $region43: #{tpu_custom_call.1} parent=5 // pred_region
        %s343 = ssub.s32 %s15, 2
        // Predicated region
        $region45: #{tpu_custom_call.1} parent=43 // pred_check
          %p344 = pneg %p112
        $region46: #{tpu_custom_call.1} parent=43 // pred_check_branch
          %346 = sbr.rel (%p344) target = $region48
        $region47: #{tpu_custom_call.1} parent=43 // pred_region
          %s347 = sand.u32 %s97, 1
          %s348 = scalar_lea.sflag [#allocation4], %s347
          %s349 = sand.u32 %s97, 1
          %s350 = smul.addr %s349, 8
          %s351 = scalar_lea.vmem [#allocation5], %s350
          %353 = dma.done %s348, 128
        $region48: #{tpu_custom_call.1} parent=43 // pred_fallthru
          _
      $region44: #{tpu_custom_call.1} parent=5 // pred_fallthru
        _
    $region6: #{tpu_custom_call.1} parent=1 // loop_footer
      %s19 = sadd.s32 1, %s15
    $region7: #{tpu_custom_call.1} parent=1 // loop_footer_branch
      %14 = sbr.rel target = $region3
    $region8: #{tpu_custom_call.1} parent=1 // loop_exit
      _
    %354 = vsyncpa [#allocation3], 1
    %s355 = scalar_lea.sflag [#allocation3], 1
    %356 = vsyncpa %s355, 1
    %357 = vsyncpa [#allocation4], 1
    %s358 = scalar_lea.sflag [#allocation4], 1
    %359 = vsyncpa %s358, 1

</llo_original>
